<compile_context>
chip_gen: v6e
topology: v6e:2x2x1
jax: 0.10.0
libtpu: 0.0.40
codegen_flags: <defaults>
</compile_context>

<pallas_src>
import numpy as np
import jax
import jax.numpy as jnp
from jax.experimental import pallas as pl
from jax.experimental.pallas import tpu as pltpu


def _round_up(a: int, b: int) -> int:
    return ((a + b - 1) // b) * b


def _cdiv(a: int, b: int) -> int:
    return (a + b - 1) // b


def _sublane_align(dtype) -> int:
    # f32 -> 8, bf16 -> 16, int8/fp8 -> 32 (sublane packing of the second-minor dim).
    itemsize = jnp.dtype(dtype).itemsize
    return max(8, 32 // max(itemsize, 1))


def _make_base(num_features: int, num_classes: int, seed: int = 0) -> np.ndarray:
    """Deterministic re-implementation of OrthSparseLinear.__init__ buffer `base`."""
    rng = np.random.RandomState(seed)
    rnd_indices = rng.permutation(np.arange(num_features))
    n = num_features // num_classes
    feat_indices = [rnd_indices[i * n:(i + 1) * n] for i in range(num_classes)]
    rem = num_features % num_classes
    rem_indices = rng.permutation(np.arange(num_classes))[:rem]
    for i, rem_idx in enumerate(rem_indices):
        feat_indices[rem_idx] = np.append(
            feat_indices[rem_idx], rnd_indices[num_classes * n + i])
    mask = np.zeros((num_classes, num_features), dtype=np.float32)
    for i in range(num_classes):
        mask[i][feat_indices[i]] = 1.0
    # TODO(synk): the `'Sph' in cfg.reshape.type` branch (zeroing base[:, -1]) is a
    # config-only variant and is not replicated here.
    w = rng.rand(1, num_features).astype(np.float32)
    return w * mask


# ----------------------------- kernels --------------------------------------

def _osl_resident_kernel(x_ref, b_ref, o_ref):
    # One MXU matmul per row tile; the whole transposed base stays resident in VMEM.
    o_ref[...] = jnp.dot(x_ref[...], b_ref[...],
                         preferred_element_type=jnp.float32).astype(o_ref.dtype)


def _osl_ktiled_f32_kernel(x_ref, b_ref, o_ref):
    # f32 output: accumulate directly into the (VMEM-resident-across-K) output block.
    @pl.when(pl.program_id(1) == 0)
    def _():
        o_ref[...] = jnp.zeros_like(o_ref)

    o_ref[...] += jnp.dot(x_ref[...], b_ref[...], preferred_element_type=jnp.float32)


def _osl_ktiled_acc_kernel(x_ref, b_ref, o_ref, acc_ref):
    k = pl.program_id(1)

    @pl.when(k == 0)
    def _():
        acc_ref[...] = jnp.zeros_like(acc_ref)

    acc_ref[...] += jnp.dot(x_ref[...], b_ref[...], preferred_element_type=jnp.float32)

    @pl.when(k == pl.num_programs(1) - 1)
    def _():
        o_ref[...] = acc_ref[...].astype(o_ref.dtype)


# ----------------------------- wrapper ---------------------------------------

def orth_sparse_linear(x: jax.Array, base: jax.Array, *,
                       tm_max: int = 1024, fk_max: int = 1024,
                       resident_base_max_bytes: int = 8 * 1024 * 1024) -> jax.Array:
    """y = x @ base.T  with x: (..., F), base: (C, F) -> y: (..., C)."""
    *lead, F = x.shape
    C, F2 = base.shape
    assert F == F2, "feature dims of x and base must match"

    x2 = x.reshape(-1, F)
    M = x2.shape[0]

    out_dtype = x.dtype
    x_itemsize = jnp.dtype(x.dtype).itemsize
    b_itemsize = jnp.dtype(base.dtype).itemsize
    out_itemsize = jnp.dtype(out_dtype).itemsize

    C_pad = _round_up(C, 128)                 # lane-dense output / full MXU N dim
    align_m = _sublane_align(x.dtype)

    base_bytes = F * C_pad * b_itemsize
    resident = base_bytes <= resident_base_max_bytes

    if resident:
        F_block = F
        F_pad = F
    else:
        F_pad = _round_up(F, 128)
        # Largest multiple of 128 that divides F_pad and is <= fk_max (no padding blow-up).
        F_block = 128
        t = 256
        while t <= min(fk_max, F_pad):
            if F_pad % t == 0:
                F_block = t
            t += 128

    # ---- row tile -----------------------------------------------------------
    # Number of row tiles: at least cdiv(M, tm_max); force >= 2 so the "parallel"
    # M axis can shard across both v7x TensorCores (no effect on v5e/v6e).
    nt = _cdiv(M, tm_max)
    if M > align_m:
        nt = max(nt, 2)
    nt = max(nt, 1)
    tm = _round_up(_cdiv(M, nt), align_m)

    ktiled_direct = (not resident) and (jnp.dtype(out_dtype) == jnp.dtype(jnp.float32))
    acc_bytes_per_row = 0 if (resident or ktiled_direct) else C_pad * 4
    per_row_bytes = (2 * F_block * x_itemsize        # x double buffer
                     + 2 * C_pad * out_itemsize      # output buffers
                     + acc_bytes_per_row)            # f32 accumulator (if any)
    row_budget = 16 * 1024 * 1024
    tm_budget = max(align_m, (row_budget // per_row_bytes) // align_m * align_m)
    tm = min(tm, tm_budget, _round_up(tm_max, align_m))
    grid_m = _cdiv(M, tm)

    # ---- operands / specs ---------------------------------------------------
    if resident:
        # One-time layout plumbing (base is a constant buffer in real use):
        # pre-transpose and zero-pad C only. x is passed through with NO padded copy.
        base_fc = jnp.zeros((F, C_pad), base.dtype).at[:, :C].set(base.T)
        x_in = x2
        grid = (grid_m,)
        in_specs = [
            pl.BlockSpec((tm, F), lambda i: (i, 0)),        # x row tile (full F)
            pl.BlockSpec((F, C_pad), lambda i: (0, 0)),     # resident base: fetched once
        ]
        out_specs = pl.BlockSpec((tm, C_pad), lambda i: (i, 0))
        scratch_shapes = []
        kernel = _osl_resident_kernel
        dims = ("parallel",)
    else:
        base_fc = jnp.zeros((F_pad, C_pad), base.dtype).at[:F, :C].set(base.T)
        if F_pad != F:
            # Gate the pad: only the feature tail gets zero-padded; M is never padded.
            x_in = jnp.zeros((M, F_pad), x.dtype).at[:, :F].set(x2)
        else:
            x_in = x2
        grid = (grid_m, F_pad // F_block)
        in_specs = [
            pl.BlockSpec((tm, F_block), lambda i, k: (i, k)),
            pl.BlockSpec((F_block, C_pad), lambda i, k: (k, 0)),
        ]
        out_specs = pl.BlockSpec((tm, C_pad), lambda i, k: (i, 0))
        if ktiled_direct:
            kernel = _osl_ktiled_f32_kernel
            scratch_shapes = []
        else:
            kernel = _osl_ktiled_acc_kernel
            scratch_shapes = [pltpu.VMEM((tm, C_pad), jnp.float32)]
        dims = ("parallel", "arbitrary")

    # ---- VMEM limit: actual footprint + headroom, capped at ~80% of capacity.
    vmem_bytes = tm * per_row_bytes + 2 * F_block * C_pad * b_itemsize
    try:
        vmem_cap = int(pltpu.get_tpu_info().vmem_capacity_bytes)
    except Exception:
        vmem_cap = 64 * 1024 * 1024   # conservative (v7x per-TensorCore)
    vmem_limit = int(min(max(vmem_bytes + vmem_bytes // 4 + (4 << 20), 16 << 20),
                         int(0.8 * vmem_cap)))

    out = pl.pallas_call(
        kernel,
        out_shape=jax.ShapeDtypeStruct((M, C_pad), out_dtype),
        grid_spec=pltpu.PrefetchScalarGridSpec(
            num_scalar_prefetch=0,
            grid=grid,
            in_specs=in_specs,
            out_specs=out_specs,
            scratch_shapes=scratch_shapes),
        compiler_params=pltpu.CompilerParams(
            dimension_semantics=dims,
            vmem_limit_bytes=vmem_limit),
    )(x_in, base_fc)

    return out[:, :C].reshape(*lead, C)


if __name__ == "__main__":
    num_features = 32
    num_classes = 8

    # Deterministic buffer setup mirroring the module __init__.
    base = jnp.asarray(_make_base(num_features, num_classes, seed=0))   # (C, F)

    # Deterministic input with leading batch dims: (2, 8, 32) -> flattened M = 16.
    key = jax.random.PRNGKey(0)
    x = jax.random.normal(key, (2, 8, num_features), dtype=jnp.float32)

    y = orth_sparse_linear(x, base)
    y = jax.block_until_ready(y)

    # Pure-JAX reference check: F.linear(x, base) == x @ base.T
    y_ref = x @ base.T
    np.testing.assert_allclose(np.asarray(y), np.asarray(y_ref), rtol=1e-5, atol=1e-5)

    print("KERNEL_OK")
</pallas_src>

<mosaic_0001>
module attributes {stable_mosaic.version = 11 : i64} {
  func.func @_osl_resident_kernel(%arg0: i32, %arg1: memref<8x32xf32, #tpu.memory_space<vmem>>, %arg2: memref<32x128xf32, #tpu.memory_space<vmem>>, %arg3: memref<8x128xf32, #tpu.memory_space<vmem>>) attributes {dimension_semantics = [#tpu.dimension_semantics<parallel>], iteration_bounds = array<i64: 2>, scalar_prefetch = 0 : i64, scratch_operands = 0 : i64, tpu.core_type = #tpu.core_type<tc>, window_params = [{transform_indices = @transform_0, window_bounds = array<i64: 8, 32>}, {pipeline_mode = #tpu.pipeline_mode<synchronous>, transform_indices = @transform_1, window_bounds = array<i64: 32, 128>}, {transform_indices = @transform_2, window_bounds = array<i64: 8, 128>}]} {
    %c0 = arith.constant 0 : index
    %c0_0 = arith.constant 0 : index
    %0 = vector.load %arg1[%c0, %c0_0] : memref<8x32xf32, #tpu.memory_space<vmem>>, vector<8x32xf32>
    %c0_1 = arith.constant 0 : index
    %c0_2 = arith.constant 0 : index
    %1 = vector.load %arg2[%c0_1, %c0_2] : memref<32x128xf32, #tpu.memory_space<vmem>>, vector<32x128xf32>
    %cst = arith.constant dense<0.000000e+00> : vector<8x128xf32>
    %2 = tpu.matmul %0, %1, %cst {dimension_numbers = #tpu.dot_dimension_numbers<[1], [0], [0], [1], [0, 0, 1, 1], [], []>} : vector<8x32xf32>, vector<32x128xf32>, vector<8x128xf32> -> vector<8x128xf32>
    %c0_3 = arith.constant 0 : index
    %c0_4 = arith.constant 0 : index
    %3 = vector.load %arg3[%c0_3, %c0_4] : memref<8x128xf32, #tpu.memory_space<vmem>>, vector<8x128xf32>
    tpu.vector_store %arg3[%c0_3, %c0_4], %2 {strides = array<i32>} : memref<8x128xf32, #tpu.memory_space<vmem>>, vector<8x128xf32>,
    return
  }
  func.func @transform_0(%arg0: i32) -> (i32, i32) {
    %c0_i32 = arith.constant 0 : i32
    %c0_i32_0 = arith.constant 0 : i32
    return %arg0, %c0_i32 : i32, i32
  }
  func.func @transform_1(%arg0: i32) -> (i32, i32) {
    %c0_i32 = arith.constant 0 : i32
    %c0_i32_0 = arith.constant 0 : i32
    %c0_i32_1 = arith.constant 0 : i32
    return %c0_i32, %c0_i32_0 : i32, i32
  }
  func.func @transform_2(%arg0: i32) -> (i32, i32) {
    %c0_i32 = arith.constant 0 : i32
    %c0_i32_0 = arith.constant 0 : i32
    return %arg0, %c0_i32 : i32, i32
  }
}

</mosaic_0001>

<llo_original>
// kernel: tpu_custom_call.1
$region0: #{tpu_custom_call.1}
  #allocation0 [shape = 'u32[]', space=smem, size = 0x4, offset = 0x4, fixed_abs, tag = 'smem constant byte address 0x4 - core index']
  #allocation1 [shape = 'u32[144,128]{1,0:T(1,128)}', space=vmem, size = 0x12000, scoped, tag = 'internal scratch']
  %s0 = inlined_call_operand.hbm [shape: f32[16,32], index: 0, kind: input, shape index: {}]
  %s1 = inlined_call_operand.hbm [shape: f32[32,128], index: 1, kind: input, shape index: {}]
  %s2 = inlined_call_operand.hbm [shape: f32[16,128], index: 2, kind: output, shape index: {}]
  %s3 = sld [smem:[#allocation0]]
  $region49: #{tpu_custom_call.1} parent=0
    _
  %s5 = ssub.s32 1, %s3
  %s6 = scalar_select 0, %s5, %s3
  $region1: #{tpu_custom_call.1} parent=0
    #allocation2 [shape = 'u8[8192]{0}', space=vmem, size = 0x2000, scoped, tag = 'input window, operand 0']
    #allocation3 [shape = 's32[2]{0}', space=sflag, size = 0x8, scoped, tag = 'scoped memory for tpu_custom_call.1']
    #allocation4 [shape = 's32[2]{0}', space=sflag, size = 0x8, scoped, tag = 'scoped memory for tpu_custom_call.1']
    #allocation5 [shape = 'u8[16384]{0}', space=vmem, size = 0x4000, scoped, tag = 'input window, operand 1, single buffered']
    #allocation6 [shape = 's32[1]{0}', space=sflag, size = 0x4, scoped, tag = 'scoped memory for tpu_custom_call.1']
    #allocation7 [shape = 'u8[8192]{0}', space=vmem, size = 0x2000, scoped, tag = 'output window, operand 0']
    %7 = vsyncpa [#allocation3], 0
    %s8 = scalar_lea.sflag [#allocation3], 1
    %9 = vsyncpa %s8, 0
    %10 = vsyncpa [#allocation6], 0
    %11 = vsyncpa [#allocation4], 0
    %s12 = scalar_lea.sflag [#allocation4], 1
    %13 = vsyncpa %s12, 0
    loop: start=0, step=1, limit=4
    $region2: #{tpu_custom_call.1} parent=1 // loop_pre_header
      _
    $region3: #{tpu_custom_call.1} parent=1 // loop_header
      %s15 = sphi 0, %s19
      %p16 = scmp.ge.s32.totalorder %s15, 4
      %s25 = sphi 0, %s27
      %s28 = sphi 0, %s25
      %s29 = sphi 0, %s28
      %s45 = sphi 0, %s29
      %s49 = sphi 0, %s49
      %s51 = sphi 0, %s49
      %s52 = sphi 0, %s51
      %s66 = sphi 0, %s52
      %s72 = sphi 0, %s74
      %s75 = sphi 0, %s72
      %s76 = sphi 0, %s75
      %s92 = sphi 0, %s76
    $region4: #{tpu_custom_call.1} parent=1 // loop_header_branch
      %18 = sbr.rel (%p16) target = $region8
    $region5: #{tpu_custom_call.1} parent=1 // loop_body
      %s20 = ssub.s32 %s15, 1
      %s21 = ssub.s32 %s15, 2
      %s22 = sadd.s32 %s15, 1
      %s23 = ssub.s32 %s15, %s22
      %p24 = scmp.eq.s32.totalorder %s23, 0
      %s26 = sadd.s32 %s25, 1
      %s27 = scalar_select %p24, %s25, %s26
      %p30 = pneg %p24
      %p31 = scmp.eq.s32.totalorder %s15, 1
      %p32 = por %p30, %p31
      %p33 = scmp.ne.s32.totalorder %s25, %s28
      %p34 = scmp.eq.s32.totalorder %s15, 0
      %p35 = por %p33, %p34
      %p36 = scmp.ne.s32.totalorder %s25, %s28
      %p37 = scmp.eq.s32.totalorder %s20, 1
      %p38 = por %p36, %p37
      %p39 = scmp.ne.s32.totalorder %s28, %s29
      %p40 = scmp.eq.s32.totalorder %s20, 0
      %p41 = por %p39, %p40
      %p42 = scmp.ne.s32.totalorder %s28, %s29
      %p43 = scmp.eq.s32.totalorder %s21, 1
      %p44 = por %p42, %p43
      %p46 = scmp.ne.s32.totalorder %s29, %s45
      %p47 = scmp.eq.s32.totalorder %s21, 0
      %p48 = por %p46, %p47
      %s50 = sadd.s32 %s49, 1
      %p53 = scmp.eq.s32.totalorder %s15, 1
      %p54 = scmp.ne.s32.totalorder %s49, %s51
      %p55 = scmp.eq.s32.totalorder %s15, 0
      %p56 = por %p54, %p55
      %p57 = scmp.ne.s32.totalorder %s49, %s51
      %p58 = scmp.eq.s32.totalorder %s20, 1
      %p59 = por %p57, %p58
      %p60 = scmp.ne.s32.totalorder %s51, %s52
      %p61 = scmp.eq.s32.totalorder %s20, 0
      %p62 = por %p60, %p61
      %p63 = scmp.ne.s32.totalorder %s51, %s52
      %p64 = scmp.eq.s32.totalorder %s21, 1
      %p65 = por %p63, %p64
      %p67 = scmp.ne.s32.totalorder %s52, %s66
      %p68 = scmp.eq.s32.totalorder %s21, 0
      %p69 = por %p67, %p68
      %s70 = ssub.s32 %s15, %s22
      %p71 = scmp.eq.s32.totalorder %s70, 0
      %s73 = sadd.s32 %s72, 1
      %s74 = scalar_select %p71, %s72, %s73
      %p77 = pneg %p71
      %p78 = scmp.eq.s32.totalorder %s15, 1
      %p79 = por %p77, %p78
      %p80 = scmp.ne.s32.totalorder %s72, %s75
      %p81 = scmp.eq.s32.totalorder %s15, 0
      %p82 = por %p80, %p81
      %p83 = scmp.ne.s32.totalorder %s72, %s75
      %p84 = scmp.eq.s32.totalorder %s20, 1
      %p85 = por %p83, %p84
      %p86 = scmp.ne.s32.totalorder %s75, %s76
      %p87 = scmp.eq.s32.totalorder %s20, 0
      %p88 = por %p86, %p87
      %p89 = scmp.ne.s32.totalorder %s75, %s76
      %p90 = scmp.eq.s32.totalorder %s21, 1
      %p91 = por %p89, %p90
      %p93 = scmp.ne.s32.totalorder %s76, %s92
      %p94 = scmp.eq.s32.totalorder %s21, 0
      %p95 = por %p93, %p94
      %p96 = scmp.le.s32.totalorder 1, %s15
      %p97 = scmp.lt.s32.totalorder %s15, 3
      %p98 = pnand %p96, %p97
      %p99 = pneg %p98
      // Predicated region
      $region9: #{tpu_custom_call.1} parent=5 // pred_check
        _
      $region10: #{tpu_custom_call.1} parent=5 // pred_check_branch
        %101 = sbr.rel (%p98) target = $region12
      $region11: #{tpu_custom_call.1} parent=5 // pred_region
        %s102 = ssub.s32 %s15, 1
        // Predicated region
        $region13: #{tpu_custom_call.1} parent=11 // pred_check
          %p103 = pneg %p62
        $region14: #{tpu_custom_call.1} parent=11 // pred_check_branch
          %105 = sbr.rel (%p103) target = $region16
        $region15: #{tpu_custom_call.1} parent=11 // pred_region
          %s107 = ssub.s32 512, 512
          %108 = vsyncadd [#allocation6], %s107
          %s109 = sshll.u32 [#allocation5], 4
          %s110 = int_to_ptr.vmem [resolvable:$true] %s109
          %115 = dma.hbm_to_vmem [thread:$0]  %s1, 512, %s110, [#allocation6], 128, 128, 8
        $region16: #{tpu_custom_call.1} parent=11 // pred_fallthru
          _
      $region12: #{tpu_custom_call.1} parent=5 // pred_fallthru
        _
      %p116 = scmp.lt.s32.totalorder %s15, 2
      // Predicated region
      $region17: #{tpu_custom_call.1} parent=5 // pred_check
        %p117 = pneg %p116
      $region18: #{tpu_custom_call.1} parent=5 // pred_check_branch
        %119 = sbr.rel (%p117) target = $region20
      $region19: #{tpu_custom_call.1} parent=5 // pred_region
        // Predicated region
        $region21: #{tpu_custom_call.1} parent=19 // pred_check
          %p120 = pneg %p35
        $region22: #{tpu_custom_call.1} parent=19 // pred_check_branch
          %122 = sbr.rel (%p120) target = $region24
        $region23: #{tpu_custom_call.1} parent=19 // pred_region
          %s123 = sand.u32 %s25, 1
          %s124 = scalar_lea.sflag [#allocation3], %s123
          %s125 = sand.u32 %s25, 1
          %s126 = smul.addr %s125, 8
          %s127 = scalar_lea.vmem [#allocation2], %s126
          %s129 = ssub.s32 128, 128
          %130 = vsyncadd %s124, %s129
          %s131 = smul.addr %s15, 128
          %s132 = scalar_lea.hbm %s0, %s131
          %s134 = sshll.u32 %s127, 4
          %s135 = int_to_ptr.vmem [resolvable:$true] %s134
          %137 = dma.hbm_to_vmem [thread:$0]  %s132, 128, %s135, %s124
        $region24: #{tpu_custom_call.1} parent=19 // pred_fallthru
          _
      $region20: #{tpu_custom_call.1} parent=5 // pred_fallthru
        _
      %p138 = scmp.le.s32.totalorder 1, %s15
      %p139 = scmp.lt.s32.totalorder %s15, 3
      %p140 = pnand %p138, %p139
      %p141 = pneg %p140
      // Predicated region
      $region25: #{tpu_custom_call.1} parent=5 // pred_check
        _
      $region26: #{tpu_custom_call.1} parent=5 // pred_check_branch
        %143 = sbr.rel (%p140) target = $region28
      $region27: #{tpu_custom_call.1} parent=5 // pred_region
        %s144 = ssub.s32 %s15, 1
        %s145 = sand.u32 %s28, 1
        %s146 = scalar_lea.sflag [#allocation3], %s145
        %s147 = sand.u32 %s28, 1
        %s148 = smul.addr %s147, 8
        %s149 = scalar_lea.vmem [#allocation2], %s148
        // Predicated region
        $region29: #{tpu_custom_call.1} parent=27 // pred_check
          %p150 = pneg %p41
        $region30: #{tpu_custom_call.1} parent=27 // pred_check_branch
          %152 = sbr.rel (%p150) target = $region32
        $region31: #{tpu_custom_call.1} parent=27 // pred_region
          %153 = dma.done %s146, 128
        $region32: #{tpu_custom_call.1} parent=27 // pred_fallthru
          _
        // Predicated region
        $region33: #{tpu_custom_call.1} parent=27 // pred_check
          %p154 = pneg %p62
        $region34: #{tpu_custom_call.1} parent=27 // pred_check_branch
          %156 = sbr.rel (%p154) target = $region36
        $region35: #{tpu_custom_call.1} parent=27 // pred_region
          %157 = dma.done [#allocation6], 512
        $region36: #{tpu_custom_call.1} parent=27 // pred_fallthru
          _
        %s158 = sand.u32 %s28, 1
        %s159 = scalar_lea.sflag [#allocation3], %s158
        %s160 = sand.u32 %s28, 1
        %s161 = smul.addr %s160, 8
        %s162 = scalar_lea.vmem [#allocation2], %s161
        %p163 = pneg %p41
        %p164 = pneg %p38
        %p165 = pneg %p62
        %p166 = pneg %p59
        %p167 = pneg %p88
        %p168 = pneg %p85
        %s169 = sand.u32 %s75, 1
        %s170 = scalar_lea.sflag [#allocation4], %s169
        %s171 = sand.u32 %s75, 1
        %s172 = smul.addr %s171, 8
        %s173 = scalar_lea.vmem [#allocation7], %s172
        %v174 = vld [vmem:[%s149] sm:$0xff]
        %v175 = vld [vmem:[#allocation5] sm:$0xff]
        %v176 = vld [vmem:[#allocation5 + $0x8] sm:$0xff]
        %v177 = vld [vmem:[#allocation5 + $0x10] sm:$0xff]
        %v178 = vld [vmem:[#allocation5 + $0x18] sm:$0xff]
        %vm179 = vcmask 261120
        %v181 = vsel %vm179, %v174, 0
        %183 = vmatprep.subr.mxu0 0.0
        %184 = vmatpush1.msra.mxu0 0.0
        %185 = vmatprep.subr.mxu0 0.0
        %186 = vmatpush1.msra.mxu0 0.0
        %187 = vmatprep.subr.mxu0 0.0
        %188 = vmatpush1.msra.mxu0 0.0
        %189 = vmatprep.subr.mxu0 0.0
        %190 = vmatpush1.msra.mxu0 0.0
        %191 = vmatprep.subr.mxu0 0.0
        %192 = vmatpush1.msra.mxu0 0.0
        %193 = vmatprep.subr.mxu0 0.0
        %194 = vmatpush1.msra.mxu0 0.0
        %195 = vmatprep.subr.mxu0 0.0
        %196 = vmatpush1.msra.mxu0 0.0
        %197 = vmatprep.subr.mxu0 0.0
        %198 = vmatpush1.msra.mxu0 0.0
        %199 = vmatprep.subr.mxu0 0.0
        %200 = vmatpush1.msra.mxu0 0.0
        %201 = vmatprep.subr.mxu0 0.0
        %202 = vmatpush1.msra.mxu0 0.0
        %203 = vmatprep.subr.mxu0 0.0
        %204 = vmatpush1.msra.mxu0 0.0
        %205 = vmatprep.subr.mxu0 0.0
        %206 = vmatpush1.msra.mxu0 0.0
        %207 = vmatprep.subr.mxu0 0.0
        %208 = vmatpush1.msra.mxu0 %v178
        %209 = vmatprep.subr.mxu0 0.0
        %210 = vmatpush1.msra.mxu0 %v177
        %211 = vmatprep.subr.mxu0 0.0
        %212 = vmatpush1.msra.mxu0 %v176
        %213 = vmatprep.subr.mxu0 0.0
        %214 = vmatpush1.msra.mxu0 %v175
        %215 = vmatprep.subr.mxu0 0.0
        %216 = vmatpush2.msra.mxu0 0.0
        %217 = vmatprep.subr.mxu0 0.0
        %218 = vmatpush2.msra.mxu0 0.0
        %219 = vmatprep.subr.mxu0 0.0
        %220 = vmatpush2.msra.mxu0 0.0
        %221 = vmatprep.subr.mxu0 0.0
        %222 = vmatpush2.msra.mxu0 0.0
        %223 = vmatprep.subr.mxu0 0.0
        %224 = vmatpush2.msra.mxu0 0.0
        %225 = vmatprep.subr.mxu0 0.0
        %226 = vmatpush2.msra.mxu0 0.0
        %227 = vmatprep.subr.mxu0 0.0
        %228 = vmatpush2.msra.mxu0 0.0
        %229 = vmatprep.subr.mxu0 0.0
        %230 = vmatpush2.msra.mxu0 0.0
        %231 = vmatprep.subr.mxu0 0.0
        %232 = vmatpush2.msra.mxu0 0.0
        %233 = vmatprep.subr.mxu0 0.0
        %234 = vmatpush2.msra.mxu0 0.0
        %235 = vmatprep.subr.mxu0 0.0
        %236 = vmatpush2.msra.mxu0 0.0
        %237 = vmatprep.subr.mxu0 0.0
        %238 = vmatpush2.msra.mxu0 0.0
        %239 = vmatprep.subr.mxu0 0.0
        %240 = vmatpush2.msra.mxu0 0.0
        %241 = vmatprep.subr.mxu0 0.0
        %242 = vmatpush2.msra.mxu0 0.0
        %243 = vmatprep.subr.mxu0 0.0
        %244 = vmatpush2.msra.mxu0 0.0
        %245 = vmatprep.subr.mxu0 0.0
        %246 = vmatpush2.msra.mxu0 0.0
        %247 = vmatprep.mubr.f32.mxu0 0.0
        %248 = vmatmul.mubr.f32.gmra.mxu0 %v181
        %v249 = vpop.f32.mrf.mxu0
        %v250 = vadd.f32 0.0, %v249
        %v251 = vpop.f32.mrf.mxu0
        %252 = vdwg.mxu0
        %253 = vst [vmem:[%s173] sm:$0xff] %v250
        %s254 = sand.u32 %s75, 1
        %s255 = scalar_lea.sflag [#allocation4], %s254
        %s256 = sand.u32 %s75, 1
        %s257 = smul.addr %s256, 8
        %s258 = scalar_lea.vmem [#allocation7], %s257
        // Predicated region
        $region37: #{tpu_custom_call.1} parent=27 // pred_check
          %p259 = pneg %p85
        $region38: #{tpu_custom_call.1} parent=27 // pred_check_branch
          %261 = sbr.rel (%p259) target = $region40
        $region39: #{tpu_custom_call.1} parent=27 // pred_region
          %s263 = ssub.s32 128, 128
          %264 = vsyncadd %s255, %s263
          %s265 = smul.addr %s20, 128
          %s266 = scalar_lea.hbm %s2, %s265
          %s268 = sshll.u32 %s258, 4
          %s269 = int_to_ptr.vmem [resolvable:$true] %s268
          %271 = dma.vmem_to_hbm [thread:$0]  %s269, 128, %s266, %s255
        $region40: #{tpu_custom_call.1} parent=27 // pred_fallthru
          _
      $region28: #{tpu_custom_call.1} parent=5 // pred_fallthru
        _
      %p272 = scmp.le.s32.totalorder 2, %s15
      // Predicated region
      $region41: #{tpu_custom_call.1} parent=5 // pred_check
        %p273 = pneg %p272
      $region42: #{tpu_custom_call.1} parent=5 // pred_check_branch
        %275 = sbr.rel (%p273) target = $region44
      $region43: #{tpu_custom_call.1} parent=5 // pred_region
        %s276 = ssub.s32 %s15, 2
        // Predicated region
        $region45: #{tpu_custom_call.1} parent=43 // pred_check
          %p277 = pneg %p91
        $region46: #{tpu_custom_call.1} parent=43 // pred_check_branch
          %279 = sbr.rel (%p277) target = $region48
        $region47: #{tpu_custom_call.1} parent=43 // pred_region
          %s280 = sand.u32 %s76, 1
          %s281 = scalar_lea.sflag [#allocation4], %s280
          %s282 = sand.u32 %s76, 1
          %s283 = smul.addr %s282, 8
          %s284 = scalar_lea.vmem [#allocation7], %s283
          %285 = dma.done %s281, 128
        $region48: #{tpu_custom_call.1} parent=43 // pred_fallthru
          _
      $region44: #{tpu_custom_call.1} parent=5 // pred_fallthru
        _
    $region6: #{tpu_custom_call.1} parent=1 // loop_footer
      %s19 = sadd.s32 1, %s15
    $region7: #{tpu_custom_call.1} parent=1 // loop_footer_branch
      %14 = sbr.rel target = $region3
    $region8: #{tpu_custom_call.1} parent=1 // loop_exit
      _
    %286 = vsyncpa [#allocation3], 1
    %s287 = scalar_lea.sflag [#allocation3], 1
    %288 = vsyncpa %s287, 1
    %289 = vsyncpa [#allocation6], 1
    %290 = vsyncpa [#allocation4], 1
    %s291 = scalar_lea.sflag [#allocation4], 1
    %292 = vsyncpa %s291, 1

</llo_original>
